<compile_context>
chip_gen: v6e
topology: v6e:2x2x1
jax: 0.10.0
libtpu: 0.0.40
codegen_flags: <defaults>
</compile_context>

<pallas_src>
import jax
import jax.numpy as jnp
from jax.experimental import pallas as pl
from jax.experimental.pallas import tpu as pltpu

IN_DIM = 28 * 28   # 784
HID = 64
OUT_DIM = 10
LANE = 128         # padded hidden width (full MXU lanes)
OUT_PAD = 16       # stored output width (cols 10:16 are junk, sliced off)
NEG = -1.0e30      # bias for padded logit columns -> exp() underflows to 0

TB_MAX = 2048      # default max batch-tile rows
TB_MIN_SPLIT = 256 # only force >=2 grid steps when each tile would be >= this


def mlp_kernel(x_ref, w1_ref, w23_ref, w4_ref, b_ref, o_ref):
    """Whole-network forward for one (tb, 784) batch tile, entirely in VMEM.

    x_ref:   (tb, 784)     f32  (cast to bf16 in-kernel, hidden under DMA)
    w1_ref:  (784, 128)    bf16 (cols 64:128 zero)
    w23_ref: (2, 128, 128) bf16 (fc2, fc3; padded rows/cols zero)
    w4_ref:  (128, 128)    bf16 (rows 64:, cols 10: zero)
    b_ref:   (4, 128)      f32  (b1,b2,b3 padded with 0; b4 padded with -1e30)
    o_ref:   (tb, 16)      f32  (log-probs in cols 0:10, junk in 10:16)
    """
    x = x_ref[...].astype(jnp.bfloat16)   # in-kernel cast: no extra HBM pass

    h = jnp.dot(x, w1_ref[...], preferred_element_type=jnp.float32) + b_ref[0:1, :]
    h = jnp.maximum(h, 0.0)

    h = jnp.dot(h.astype(jnp.bfloat16), w23_ref[0],
                preferred_element_type=jnp.float32) + b_ref[1:2, :]
    h = jnp.maximum(h, 0.0)

    h = jnp.dot(h.astype(jnp.bfloat16), w23_ref[1],
                preferred_element_type=jnp.float32) + b_ref[2:3, :]
    h = jnp.maximum(h, 0.0)

    logits = jnp.dot(h.astype(jnp.bfloat16), w4_ref[...],
                     preferred_element_type=jnp.float32) + b_ref[3:4, :]

    # Numerically-stable log_softmax along the class (last) dim.  Padded
    # columns carry -1e30 and contribute exp(...) == 0 to the denominator.
    m = jnp.max(logits, axis=-1, keepdims=True)
    shifted = logits - m
    lse = jnp.log(jnp.sum(jnp.exp(shifted), axis=-1, keepdims=True))
    o_ref[...] = (shifted - lse)[:, :OUT_PAD]


def _round_up(n, m):
    return ((n + m - 1) // m) * m


def _choose_batch_tile(B, tb_max=TB_MAX):
    """Pick a batch tile: <= tb_max rows, >=2 grid steps for large batches
    (feeds both v7x TensorCores), 16-row aligned, no large batch padding."""
    n_tiles = pl.cdiv(B, tb_max)
    if B >= 2 * TB_MIN_SPLIT:
        n_tiles = max(n_tiles, 2)
    tb = _round_up(pl.cdiv(B, n_tiles), 16)
    if tb >= B:          # single full-extent block (always layout-legal)
        tb = B
    return tb


def _pack_params(params):
    """Pad 64->128 / 10->128, stack, and cast weights to bf16."""
    w1 = jnp.zeros((IN_DIM, LANE), jnp.float32).at[:, :HID].set(params["w1"])
    w2 = jnp.zeros((LANE, LANE), jnp.float32).at[:HID, :HID].set(params["w2"])
    w3 = jnp.zeros((LANE, LANE), jnp.float32).at[:HID, :HID].set(params["w3"])
    w4 = jnp.zeros((LANE, LANE), jnp.float32).at[:HID, :OUT_DIM].set(params["w4"])

    b = jnp.zeros((4, LANE), jnp.float32)
    b = b.at[0, :HID].set(params["b1"][0])
    b = b.at[1, :HID].set(params["b2"][0])
    b = b.at[2, :HID].set(params["b3"][0])
    b = b.at[3, :].set(NEG)                     # pad cols -> -1e30 (inert in softmax)
    b = b.at[3, :OUT_DIM].set(params["b4"][0])

    w23 = jnp.stack([w2, w3])                   # (2, 128, 128)
    return (w1.astype(jnp.bfloat16), w23.astype(jnp.bfloat16),
            w4.astype(jnp.bfloat16), b)


def net_forward(x, params, tb=None):
    """x: (B, 784) float32 -> (B, 10) float32 log-probabilities."""
    B = x.shape[0]
    w1, w23, w4, b = _pack_params(params)

    if tb is None:
        tb = _choose_batch_tile(B)
    grid = (pl.cdiv(B, tb),)   # ragged final block masked by Pallas (no jnp.pad)

    flops = 2 * B * (IN_DIM * LANE + 3 * LANE * LANE)
    bytes_accessed = (B * IN_DIM * 4                # f32 x stream (dominant)
                      + w1.size * 2 + w23.size * 2 + w4.size * 2 + b.size * 4
                      + B * OUT_PAD * 4)            # narrow f32 output

    out = pl.pallas_call(
        mlp_kernel,
        out_shape=jax.ShapeDtypeStruct((B, OUT_PAD), jnp.float32),
        grid=grid,
        in_specs=[
            pl.BlockSpec((tb, IN_DIM), lambda i: (i, 0)),       # x: streamed per tile
            pl.BlockSpec(w1.shape, lambda i: (0, 0)),           # weights: resident
            pl.BlockSpec(w23.shape, lambda i: (0, 0, 0)),
            pl.BlockSpec(w4.shape, lambda i: (0, 0)),
            pl.BlockSpec(b.shape, lambda i: (0, 0)),
        ],
        out_specs=pl.BlockSpec((tb, OUT_PAD), lambda i: (i, 0)),
        compiler_params=pltpu.CompilerParams(
            dimension_semantics=("parallel",),
            vmem_limit_bytes=48 << 20,
        ),
        cost_estimate=pl.CostEstimate(
            flops=flops,
            transcendentals=B * LANE,
            bytes_accessed=bytes_accessed,
        ),
    )(x, w1, w23, w4, b)

    return out[:, :OUT_DIM]


def init_params(key):
    """Deterministic init mimicking PyTorch Linear's U(-1/sqrt(fan_in), 1/sqrt(fan_in))."""
    def linear(key, fan_in, fan_out):
        kw, kb = jax.random.split(key)
        bound = 1.0 / jnp.sqrt(fan_in)
        w = jax.random.uniform(kw, (fan_in, fan_out), jnp.float32, -bound, bound)
        b = jax.random.uniform(kb, (1, fan_out), jnp.float32, -bound, bound)
        return w, b

    k1, k2, k3, k4 = jax.random.split(key, 4)
    w1, b1 = linear(k1, IN_DIM, HID)
    w2, b2 = linear(k2, HID, HID)
    w3, b3 = linear(k3, HID, HID)
    w4, b4 = linear(k4, HID, OUT_DIM)
    return dict(w1=w1, b1=b1, w2=w2, b2=b2, w3=w3, b3=b3, w4=w4, b4=b4)


def reference_forward_f32(x, p):
    """Pure-f32 reference (matches PyTorch semantics)."""
    h = jnp.maximum(x @ p["w1"] + p["b1"], 0.0)
    h = jnp.maximum(h @ p["w2"] + p["b2"], 0.0)
    h = jnp.maximum(h @ p["w3"] + p["b3"], 0.0)
    logits = h @ p["w4"] + p["b4"]
    return jax.nn.log_softmax(logits, axis=1)


def reference_forward_bf16(x, p):
    """Same-precision reference (bf16 operands, f32 accumulation) as the kernel."""
    bf = jnp.bfloat16
    def dot(a, w):
        return jnp.dot(a.astype(bf), w.astype(bf), preferred_element_type=jnp.float32)
    h = jnp.maximum(dot(x, p["w1"]) + p["b1"], 0.0)
    h = jnp.maximum(dot(h, p["w2"]) + p["b2"], 0.0)
    h = jnp.maximum(dot(h, p["w3"]) + p["b3"], 0.0)
    logits = dot(h, p["w4"]) + p["b4"]
    return jax.nn.log_softmax(logits, axis=1)


def _check(out, x, params):
    ref_bf16 = reference_forward_bf16(x, params)
    assert jnp.allclose(out, ref_bf16, atol=2e-3, rtol=0), "mismatch vs bf16 reference"
    ref_f32 = reference_forward_f32(x, params)
    assert jnp.allclose(out, ref_f32, atol=5e-2, rtol=0), "mismatch vs f32 reference"
    assert jnp.allclose(jnp.sum(jnp.exp(out), axis=1), 1.0, atol=1e-4)


if __name__ == "__main__":
    key = jax.random.PRNGKey(0)
    kx, kp = jax.random.split(key)
    params = init_params(kp)

    # Small batch: single full-extent block.
    B = 8
    x = jax.random.normal(kx, (B, IN_DIM), dtype=jnp.float32)
    out = jax.block_until_ready(net_forward(x, params))
    assert out.shape == (B, OUT_DIM)
    _check(out, x, params)

    # Multi-tile grid with a ragged final block (exercises masked boundary).
    B2 = 40
    x2 = jax.random.normal(jax.random.PRNGKey(1), (B2, IN_DIM), dtype=jnp.float32)
    out2 = jax.block_until_ready(net_forward(x2, params, tb=16))
    assert out2.shape == (B2, OUT_DIM)
    _check(out2, x2, params)

    print("KERNEL_OK")
</pallas_src>

<mosaic_0001>
module attributes {stable_mosaic.version = 11 : i64} {
  func.func @mlp_kernel(%arg0: i32, %arg1: memref<8x784xf32, #tpu.memory_space<vmem>>, %arg2: memref<784x128xbf16, #tpu.memory_space<vmem>>, %arg3: memref<2x128x128xbf16, #tpu.memory_space<vmem>>, %arg4: memref<128x128xbf16, #tpu.memory_space<vmem>>, %arg5: memref<4x128xf32, #tpu.memory_space<vmem>>, %arg6: memref<8x16xf32, #tpu.memory_space<vmem>>) attributes {dimension_semantics = [#tpu.dimension_semantics<parallel>], iteration_bounds = array<i64: 1>, scalar_prefetch = 0 : i64, scratch_operands = 0 : i64, tpu.core_type = #tpu.core_type<tc>, window_params = [{transform_indices = @transform_0, window_bounds = array<i64: 8, 784>}, {pipeline_mode = #tpu.pipeline_mode<synchronous>, transform_indices = @transform_1, window_bounds = array<i64: 784, 128>}, {pipeline_mode = #tpu.pipeline_mode<synchronous>, transform_indices = @transform_2, window_bounds = array<i64: 2, 128, 128>}, {pipeline_mode = #tpu.pipeline_mode<synchronous>, transform_indices = @transform_3, window_bounds = array<i64: 128, 128>}, {pipeline_mode = #tpu.pipeline_mode<synchronous>, transform_indices = @transform_4, window_bounds = array<i64: 4, 128>}, {transform_indices = @transform_5, window_bounds = array<i64: 8, 16>}]} {
    %c0 = arith.constant 0 : index
    %c0_0 = arith.constant 0 : index
    %0 = vector.load %arg1[%c0, %c0_0] : memref<8x784xf32, #tpu.memory_space<vmem>>, vector<8x784xf32>
    %1 = arith.truncf %0 : vector<8x784xf32> to vector<8x784xbf16>
    %c0_1 = arith.constant 0 : index
    %c0_2 = arith.constant 0 : index
    %2 = vector.load %arg2[%c0_1, %c0_2] : memref<784x128xbf16, #tpu.memory_space<vmem>>, vector<784x128xbf16>
    %cst = arith.constant dense<0.000000e+00> : vector<8x128xf32>
    %3 = tpu.matmul %1, %2, %cst {dimension_numbers = #tpu.dot_dimension_numbers<[1], [0], [0], [1], [0, 0, 1, 1], [], []>} : vector<8x784xbf16>, vector<784x128xbf16>, vector<8x128xf32> -> vector<8x128xf32>
    %c0_3 = arith.constant 0 : index
    %c0_4 = arith.constant 0 : index
    %4 = vector.load %arg5[%c0_3, %c0_4] : memref<4x128xf32, #tpu.memory_space<vmem>>, vector<1x128xf32>
    %5 = vector.broadcast %4 : vector<1x128xf32> to vector<8x128xf32>
    %6 = arith.addf %3, %5 : vector<8x128xf32>
    %cst_5 = arith.constant 0.000000e+00 : f32
    %7 = vector.broadcast %cst_5 : f32 to vector<8x128xf32>
    %8 = arith.maximumf %6, %7 : vector<8x128xf32>
    %9 = arith.truncf %8 : vector<8x128xf32> to vector<8x128xbf16>
    %c0_6 = arith.constant 0 : index
    %c0_7 = arith.constant 0 : index
    %c0_8 = arith.constant 0 : index
    %10 = vector.load %arg3[%c0_6, %c0_7, %c0_8] : memref<2x128x128xbf16, #tpu.memory_space<vmem>>, vector<1x128x128xbf16>
    %11 = vector.shape_cast %10 : vector<1x128x128xbf16> to vector<128x128xbf16>
    %cst_9 = arith.constant dense<0.000000e+00> : vector<8x128xf32>
    %12 = tpu.matmul %9, %11, %cst_9 {dimension_numbers = #tpu.dot_dimension_numbers<[1], [0], [0], [1], [0, 0, 1, 1], [], []>} : vector<8x128xbf16>, vector<128x128xbf16>, vector<8x128xf32> -> vector<8x128xf32>
    %c1 = arith.constant 1 : index
    %c0_10 = arith.constant 0 : index
    %13 = vector.load %arg5[%c1, %c0_10] : memref<4x128xf32, #tpu.memory_space<vmem>>, vector<1x128xf32>
    %14 = vector.broadcast %13 : vector<1x128xf32> to vector<8x128xf32>
    %15 = arith.addf %12, %14 : vector<8x128xf32>
    %cst_11 = arith.constant 0.000000e+00 : f32
    %16 = vector.broadcast %cst_11 : f32 to vector<8x128xf32>
    %17 = arith.maximumf %15, %16 : vector<8x128xf32>
    %18 = arith.truncf %17 : vector<8x128xf32> to vector<8x128xbf16>
    %c1_12 = arith.constant 1 : index
    %c0_13 = arith.constant 0 : index
    %c0_14 = arith.constant 0 : index
    %19 = vector.load %arg3[%c1_12, %c0_13, %c0_14] : memref<2x128x128xbf16, #tpu.memory_space<vmem>>, vector<1x128x128xbf16>
    %20 = vector.shape_cast %19 : vector<1x128x128xbf16> to vector<128x128xbf16>
    %cst_15 = arith.constant dense<0.000000e+00> : vector<8x128xf32>
    %21 = tpu.matmul %18, %20, %cst_15 {dimension_numbers = #tpu.dot_dimension_numbers<[1], [0], [0], [1], [0, 0, 1, 1], [], []>} : vector<8x128xbf16>, vector<128x128xbf16>, vector<8x128xf32> -> vector<8x128xf32>
    %c2 = arith.constant 2 : index
    %c0_16 = arith.constant 0 : index
    %22 = vector.load %arg5[%c2, %c0_16] : memref<4x128xf32, #tpu.memory_space<vmem>>, vector<1x128xf32>
    %23 = vector.broadcast %22 : vector<1x128xf32> to vector<8x128xf32>
    %24 = arith.addf %21, %23 : vector<8x128xf32>
    %cst_17 = arith.constant 0.000000e+00 : f32
    %25 = vector.broadcast %cst_17 : f32 to vector<8x128xf32>
    %26 = arith.maximumf %24, %25 : vector<8x128xf32>
    %27 = arith.truncf %26 : vector<8x128xf32> to vector<8x128xbf16>
    %c0_18 = arith.constant 0 : index
    %c0_19 = arith.constant 0 : index
    %28 = vector.load %arg4[%c0_18, %c0_19] : memref<128x128xbf16, #tpu.memory_space<vmem>>, vector<128x128xbf16>
    %cst_20 = arith.constant dense<0.000000e+00> : vector<8x128xf32>
    %29 = tpu.matmul %27, %28, %cst_20 {dimension_numbers = #tpu.dot_dimension_numbers<[1], [0], [0], [1], [0, 0, 1, 1], [], []>} : vector<8x128xbf16>, vector<128x128xbf16>, vector<8x128xf32> -> vector<8x128xf32>
    %c3 = arith.constant 3 : index
    %c0_21 = arith.constant 0 : index
    %30 = vector.load %arg5[%c3, %c0_21] : memref<4x128xf32, #tpu.memory_space<vmem>>, vector<1x128xf32>
    %31 = vector.broadcast %30 : vector<1x128xf32> to vector<8x128xf32>
    %32 = arith.addf %29, %31 : vector<8x128xf32>
    %cst_22 = arith.constant dense<0xFF800000> : vector<8xf32>
    %33 = vector.multi_reduction <maximumf>, %32, %cst_22 [1] : vector<8x128xf32> to vector<8xf32>
    %34 = vector.shape_cast %33 : vector<8xf32> to vector<8x1xf32>
    %35 = vector.broadcast %34 : vector<8x1xf32> to vector<8x128xf32>
    %36 = arith.subf %32, %35 : vector<8x128xf32>
    %37 = math.exp %36 : vector<8x128xf32>
    %cst_23 = arith.constant dense<0.000000e+00> : vector<8xf32>
    %38 = vector.multi_reduction <add>, %37, %cst_23 [1] : vector<8x128xf32> to vector<8xf32>
    %39 = vector.shape_cast %38 : vector<8xf32> to vector<8x1xf32>
    %40 = math.log %39 : vector<8x1xf32>
    %41 = vector.broadcast %40 : vector<8x1xf32> to vector<8x128xf32>
    %42 = arith.subf %36, %41 : vector<8x128xf32>
    %43 = vector.extract_strided_slice %42 {offsets = [0, 0], sizes = [8, 16], strides = [1, 1]} : vector<8x128xf32> to vector<8x16xf32>
    %c0_24 = arith.constant 0 : index
    %c0_25 = arith.constant 0 : index
    %44 = vector.load %arg6[%c0_24, %c0_25] : memref<8x16xf32, #tpu.memory_space<vmem>>, vector<8x16xf32>
    tpu.vector_store %arg6[%c0_24, %c0_25], %43 {strides = array<i32>} : memref<8x16xf32, #tpu.memory_space<vmem>>, vector<8x16xf32>,
    return
  }
  func.func @transform_0(%arg0: i32) -> (i32, i32) {
    %c0_i32 = arith.constant 0 : i32
    %c0_i32_0 = arith.constant 0 : i32
    return %arg0, %c0_i32 : i32, i32
  }
  func.func @transform_1(%arg0: i32) -> (i32, i32) {
    %c0_i32 = arith.constant 0 : i32
    %c0_i32_0 = arith.constant 0 : i32
    %c0_i32_1 = arith.constant 0 : i32
    return %c0_i32, %c0_i32_0 : i32, i32
  }
  func.func @transform_2(%arg0: i32) -> (i32, i32, i32) {
    %c0_i32 = arith.constant 0 : i32
    %c0_i32_0 = arith.constant 0 : i32
    %c0_i32_1 = arith.constant 0 : i32
    %c0_i32_2 = arith.constant 0 : i32
    return %c0_i32, %c0_i32_0, %c0_i32_1 : i32, i32, i32
  }
  func.func @transform_3(%arg0: i32) -> (i32, i32) {
    %c0_i32 = arith.constant 0 : i32
    %c0_i32_0 = arith.constant 0 : i32
    %c0_i32_1 = arith.constant 0 : i32
    return %c0_i32, %c0_i32_0 : i32, i32
  }
  func.func @transform_4(%arg0: i32) -> (i32, i32) {
    %c0_i32 = arith.constant 0 : i32
    %c0_i32_0 = arith.constant 0 : i32
    %c0_i32_1 = arith.constant 0 : i32
    return %c0_i32, %c0_i32_0 : i32, i32
  }
  func.func @transform_5(%arg0: i32) -> (i32, i32) {
    %c0_i32 = arith.constant 0 : i32
    %c0_i32_0 = arith.constant 0 : i32
    return %arg0, %c0_i32 : i32, i32
  }
}

</mosaic_0001>

<llo_original>
// kernel: tpu_custom_call.1
$region0: #{tpu_custom_call.1}
  #allocation0 [shape = 'u32[]', space=smem, size = 0x4, offset = 0x4, fixed_abs, tag = 'smem constant byte address 0x4 - core index']
  #allocation1 [shape = 'u32[144,128]{1,0:T(1,128)}', space=vmem, size = 0x12000, scoped, tag = 'internal scratch']
  %s0 = inlined_call_operand.hbm [shape: f32[8,784], index: 0, kind: input, shape index: {}]
  %s1 = inlined_call_operand.hbm [shape: bf16[784,128], index: 1, kind: input, shape index: {}]
  %s2 = inlined_call_operand.hbm [shape: bf16[2,128,128], index: 2, kind: input, shape index: {}]
  %s3 = inlined_call_operand.hbm [shape: bf16[128,128], index: 3, kind: input, shape index: {}]
  %s4 = inlined_call_operand.vmem [shape: f32[4,128], index: 4, kind: input, shape index: {}]
  %s5 = inlined_call_operand.hbm [shape: f32[8,16], index: 5, kind: output, shape index: {}]
  %s6 = sld [smem:[#allocation0]]
  $region46: #{tpu_custom_call.1} parent=0
    _
  %s8 = ssub.s32 1, %s6
  %s9 = scalar_select 0, %s8, %s6
  $region1: #{tpu_custom_call.1} parent=0
    #allocation2 [shape = 'u8[28672]{0}', space=vmem, size = 0x7000, scoped, tag = 'input window, operand 0, single buffered']
    #allocation3 [shape = 's32[1]{0}', space=sflag, size = 0x4, scoped, tag = 'scoped memory for tpu_custom_call.1']
    #allocation4 [shape = 's32[1]{0}', space=sflag, size = 0x4, scoped, tag = 'scoped memory for tpu_custom_call.1']
    #allocation5 [shape = 'u8[200704]{0}', space=vmem, size = 0x31000, scoped, tag = 'input window, operand 1, single buffered']
    #allocation6 [shape = 's32[1]{0}', space=sflag, size = 0x4, scoped, tag = 'scoped memory for tpu_custom_call.1']
    #allocation7 [shape = 'u8[65536]{0}', space=vmem, size = 0x10000, scoped, tag = 'input window, operand 2, single buffered']
    #allocation8 [shape = 'u8[32768]{0}', space=vmem, size = 0x8000, scoped, tag = 'input window, operand 3, single buffered']
    #allocation9 [shape = 's32[1]{0}', space=sflag, size = 0x4, scoped, tag = 'scoped memory for tpu_custom_call.1']
    #allocation10 [shape = 'u8[4096]{0}', space=vmem, size = 0x1000, scoped, tag = 'output window, operand 0, single buffered']
    %10 = vsyncpa [#allocation3], 0
    %11 = vsyncpa [#allocation6], 0
    %12 = vsyncpa [#allocation9], 0
    %13 = vsyncpa [#allocation4], 0
    // Predicated region
    $region2: #{tpu_custom_call.1} parent=1 // pred_check
      _
    $region3: #{tpu_custom_call.1} parent=1 // pred_check_branch
      %15 = sbr.rel (0) target = $region5
    $region4: #{tpu_custom_call.1} parent=1 // pred_region
      %s17 = ssub.s32 896, 896
      %18 = vsyncadd [#allocation3], %s17
      %s20 = sshll.u32 [#allocation2], 4
      %s21 = int_to_ptr.vmem [resolvable:$true] %s20
      %23 = dma.hbm_to_vmem [thread:$0]  %s0, 896, %s21, [#allocation3]
    $region5: #{tpu_custom_call.1} parent=1 // pred_fallthru
      _
    // Predicated region
    $region6: #{tpu_custom_call.1} parent=1 // pred_check
      _
    $region7: #{tpu_custom_call.1} parent=1 // pred_check_branch
      %25 = sbr.rel (0) target = $region9
    $region8: #{tpu_custom_call.1} parent=1 // pred_region
      %s27 = ssub.s32 6272, 6272
      %28 = vsyncadd [#allocation6], %s27
      %s29 = sshll.u32 [#allocation5], 4
      %s30 = int_to_ptr.vmem [resolvable:$true] %s29
      %35 = dma.hbm_to_vmem [thread:$0]  %s1, 6272, %s30, [#allocation6], 64, 64, 4
    $region9: #{tpu_custom_call.1} parent=1 // pred_fallthru
      _
    // Predicated region
    $region10: #{tpu_custom_call.1} parent=1 // pred_check
      _
    $region11: #{tpu_custom_call.1} parent=1 // pred_check_branch
      %37 = sbr.rel (0) target = $region13
    $region12: #{tpu_custom_call.1} parent=1 // pred_region
      %s39 = ssub.s32 2048, 2048
      %40 = vsyncadd [#allocation6], %s39
      %s41 = sshll.u32 [#allocation7], 4
      %s42 = int_to_ptr.vmem [resolvable:$true] %s41
      %47 = dma.hbm_to_vmem [thread:$0]  %s2, 2048, %s42, [#allocation6], 64, 64, 4
    $region13: #{tpu_custom_call.1} parent=1 // pred_fallthru
      _
    // Predicated region
    $region14: #{tpu_custom_call.1} parent=1 // pred_check
      _
    $region15: #{tpu_custom_call.1} parent=1 // pred_check_branch
      %49 = sbr.rel (0) target = $region17
    $region16: #{tpu_custom_call.1} parent=1 // pred_region
      %s51 = ssub.s32 1024, 1024
      %52 = vsyncadd [#allocation9], %s51
      %s53 = sshll.u32 [#allocation8], 4
      %s54 = int_to_ptr.vmem [resolvable:$true] %s53
      %59 = dma.hbm_to_vmem [thread:$0]  %s3, 1024, %s54, [#allocation9], 64, 64, 4
    $region17: #{tpu_custom_call.1} parent=1 // pred_fallthru
      _
    // Predicated region
    $region18: #{tpu_custom_call.1} parent=1 // pred_check
      _
    $region19: #{tpu_custom_call.1} parent=1 // pred_check_branch
      %61 = sbr.rel (0) target = $region21
    $region20: #{tpu_custom_call.1} parent=1 // pred_region
      _
    $region21: #{tpu_custom_call.1} parent=1 // pred_fallthru
      _
    // Predicated region
    $region22: #{tpu_custom_call.1} parent=1 // pred_check
      _
    $region23: #{tpu_custom_call.1} parent=1 // pred_check_branch
      %63 = sbr.rel (0) target = $region25
    $region24: #{tpu_custom_call.1} parent=1 // pred_region
      %64 = dma.done [#allocation3], 896
    $region25: #{tpu_custom_call.1} parent=1 // pred_fallthru
      _
    // Predicated region
    $region26: #{tpu_custom_call.1} parent=1 // pred_check
      _
    $region27: #{tpu_custom_call.1} parent=1 // pred_check_branch
      %66 = sbr.rel (0) target = $region29
    $region28: #{tpu_custom_call.1} parent=1 // pred_region
      %67 = dma.done [#allocation6], 6272
    $region29: #{tpu_custom_call.1} parent=1 // pred_fallthru
      _
    // Predicated region
    $region30: #{tpu_custom_call.1} parent=1 // pred_check
      _
    $region31: #{tpu_custom_call.1} parent=1 // pred_check_branch
      %69 = sbr.rel (0) target = $region33
    $region32: #{tpu_custom_call.1} parent=1 // pred_region
      %70 = dma.done [#allocation6], 2048
    $region33: #{tpu_custom_call.1} parent=1 // pred_fallthru
      _
    // Predicated region
    $region34: #{tpu_custom_call.1} parent=1 // pred_check
      _
    $region35: #{tpu_custom_call.1} parent=1 // pred_check_branch
      %72 = sbr.rel (0) target = $region37
    $region36: #{tpu_custom_call.1} parent=1 // pred_region
      %73 = dma.done [#allocation9], 1024
    $region37: #{tpu_custom_call.1} parent=1 // pred_fallthru
      _
    %v75 = vld [vmem:[#allocation2] sm:$0xff]
    %v76 = vld [vmem:[#allocation2 + $0x8] sm:$0xff]
    %v77 = vld [vmem:[#allocation2 + $0x10] sm:$0xff]
    %v78 = vld [vmem:[#allocation2 + $0x18] sm:$0xff]
    %v79 = vld [vmem:[#allocation2 + $0x20] sm:$0xff]
    %v80 = vld [vmem:[#allocation2 + $0x28] sm:$0xff]
    %v81 = vld [vmem:[#allocation2 + $0x30] sm:$0xff]
    %v82 = vpack.c.bf16 %v75, %v75
    %v83 = vpack.c.bf16 %v76, %v76
    %v84 = vpack.c.bf16 %v77, %v77
    %v85 = vpack.c.bf16 %v78, %v78
    %v86 = vpack.c.bf16 %v79, %v79
    %v87 = vpack.c.bf16 %v80, %v80
    %v88 = vpack.c.bf16 %v81, %v81
    %v89 = vld [vmem:[#allocation5] sm:$0xf]
    %v90 = vld [vmem:[#allocation5 + $0x4] sm:$0xf]
    %v91 = vld [vmem:[#allocation5 + $0x8] sm:$0xf]
    %v92 = vld [vmem:[#allocation5 + $0xc] sm:$0xf]
    %v93 = vld [vmem:[#allocation5 + $0x10] sm:$0xf]
    %v94 = vld [vmem:[#allocation5 + $0x14] sm:$0xf]
    %v95 = vld [vmem:[#allocation5 + $0x18] sm:$0xf]
    %v96 = vld [vmem:[#allocation5 + $0x1c] sm:$0xf]
    %v97 = vld [vmem:[#allocation5 + $0x20] sm:$0xf]
    %v98 = vld [vmem:[#allocation5 + $0x24] sm:$0xf]
    %v99 = vld [vmem:[#allocation5 + $0x28] sm:$0xf]
    %v100 = vld [vmem:[#allocation5 + $0x2c] sm:$0xf]
    %v101 = vld [vmem:[#allocation5 + $0x30] sm:$0xf]
    %v102 = vld [vmem:[#allocation5 + $0x34] sm:$0xf]
    %v103 = vld [vmem:[#allocation5 + $0x38] sm:$0xf]
    %v104 = vld [vmem:[#allocation5 + $0x3c] sm:$0xf]
    %v105 = vld [vmem:[#allocation5 + $0x40] sm:$0xf]
    %v106 = vld [vmem:[#allocation5 + $0x44] sm:$0xf]
    %v107 = vld [vmem:[#allocation5 + $0x48] sm:$0xf]
    %v108 = vld [vmem:[#allocation5 + $0x4c] sm:$0xf]
    %v109 = vld [vmem:[#allocation5 + $0x50] sm:$0xf]
    %v110 = vld [vmem:[#allocation5 + $0x54] sm:$0xf]
    %v111 = vld [vmem:[#allocation5 + $0x58] sm:$0xf]
    %v112 = vld [vmem:[#allocation5 + $0x5c] sm:$0xf]
    %v113 = vld [vmem:[#allocation5 + $0x60] sm:$0xf]
    %v114 = vld [vmem:[#allocation5 + $0x64] sm:$0xf]
    %v115 = vld [vmem:[#allocation5 + $0x68] sm:$0xf]
    %v116 = vld [vmem:[#allocation5 + $0x6c] sm:$0xf]
    %v117 = vld [vmem:[#allocation5 + $0x70] sm:$0xf]
    %v118 = vld [vmem:[#allocation5 + $0x74] sm:$0xf]
    %v119 = vld [vmem:[#allocation5 + $0x78] sm:$0xf]
    %v120 = vld [vmem:[#allocation5 + $0x7c] sm:$0xf]
    %v121 = vld [vmem:[#allocation5 + $0x80] sm:$0xf]
    %v122 = vld [vmem:[#allocation5 + $0x84] sm:$0xf]
    %v123 = vld [vmem:[#allocation5 + $0x88] sm:$0xf]
    %v124 = vld [vmem:[#allocation5 + $0x8c] sm:$0xf]
    %v125 = vld [vmem:[#allocation5 + $0x90] sm:$0xf]
    %v126 = vld [vmem:[#allocation5 + $0x94] sm:$0xf]
    %v127 = vld [vmem:[#allocation5 + $0x98] sm:$0xf]
    %v128 = vld [vmem:[#allocation5 + $0x9c] sm:$0xf]
    %v129 = vld [vmem:[#allocation5 + $0xa0] sm:$0xf]
    %v130 = vld [vmem:[#allocation5 + $0xa4] sm:$0xf]
    %v131 = vld [vmem:[#allocation5 + $0xa8] sm:$0xf]
    %v132 = vld [vmem:[#allocation5 + $0xac] sm:$0xf]
    %v133 = vld [vmem:[#allocation5 + $0xb0] sm:$0xf]
    %v134 = vld [vmem:[#allocation5 + $0xb4] sm:$0xf]
    %v135 = vld [vmem:[#allocation5 + $0xb8] sm:$0xf]
    %v136 = vld [vmem:[#allocation5 + $0xbc] sm:$0xf]
    %v137 = vld [vmem:[#allocation5 + $0xc0] sm:$0xf]
    %v138 = vld [vmem:[#allocation5 + $0xc4] sm:$0xf]
    %v139 = vld [vmem:[#allocation5 + $0xc8] sm:$0xf]
    %v140 = vld [vmem:[#allocation5 + $0xcc] sm:$0xf]
    %v141 = vld [vmem:[#allocation5 + $0xd0] sm:$0xf]
    %v142 = vld [vmem:[#allocation5 + $0xd4] sm:$0xf]
    %v143 = vld [vmem:[#allocation5 + $0xd8] sm:$0xf]
    %v144 = vld [vmem:[#allocation5 + $0xdc] sm:$0xf]
    %v145 = vld [vmem:[#allocation5 + $0xe0] sm:$0xf]
    %v146 = vld [vmem:[#allocation5 + $0xe4] sm:$0xf]
    %v147 = vld [vmem:[#allocation5 + $0xe8] sm:$0xf]
    %v148 = vld [vmem:[#allocation5 + $0xec] sm:$0xf]
    %v149 = vld [vmem:[#allocation5 + $0xf0] sm:$0xf]
    %v150 = vld [vmem:[#allocation5 + $0xf4] sm:$0xf]
    %v151 = vld [vmem:[#allocation5 + $0xf8] sm:$0xf]
    %v152 = vld [vmem:[#allocation5 + $0xfc] sm:$0xf]
    %v153 = vld [vmem:[#allocation5 + $0x100] sm:$0xf]
    %v154 = vld [vmem:[#allocation5 + $0x104] sm:$0xf]
    %v155 = vld [vmem:[#allocation5 + $0x108] sm:$0xf]
    %v156 = vld [vmem:[#allocation5 + $0x10c] sm:$0xf]
    %v157 = vld [vmem:[#allocation5 + $0x110] sm:$0xf]
    %v158 = vld [vmem:[#allocation5 + $0x114] sm:$0xf]
    %v159 = vld [vmem:[#allocation5 + $0x118] sm:$0xf]
    %v160 = vld [vmem:[#allocation5 + $0x11c] sm:$0xf]
    %v161 = vld [vmem:[#allocation5 + $0x120] sm:$0xf]
    %v162 = vld [vmem:[#allocation5 + $0x124] sm:$0xf]
    %v163 = vld [vmem:[#allocation5 + $0x128] sm:$0xf]
    %v164 = vld [vmem:[#allocation5 + $0x12c] sm:$0xf]
    %v165 = vld [vmem:[#allocation5 + $0x130] sm:$0xf]
    %v166 = vld [vmem:[#allocation5 + $0x134] sm:$0xf]
    %v167 = vld [vmem:[#allocation5 + $0x138] sm:$0xf]
    %v168 = vld [vmem:[#allocation5 + $0x13c] sm:$0xf]
    %v169 = vld [vmem:[#allocation5 + $0x140] sm:$0xf]
    %v170 = vld [vmem:[#allocation5 + $0x144] sm:$0xf]
    %v171 = vld [vmem:[#allocation5 + $0x148] sm:$0xf]
    %v172 = vld [vmem:[#allocation5 + $0x14c] sm:$0xf]
    %v173 = vld [vmem:[#allocation5 + $0x150] sm:$0xf]
    %v174 = vld [vmem:[#allocation5 + $0x154] sm:$0xf]
    %v175 = vld [vmem:[#allocation5 + $0x158] sm:$0xf]
    %v176 = vld [vmem:[#allocation5 + $0x15c] sm:$0xf]
    %v177 = vld [vmem:[#allocation5 + $0x160] sm:$0xf]
    %v178 = vld [vmem:[#allocation5 + $0x164] sm:$0xf]
    %v179 = vld [vmem:[#allocation5 + $0x168] sm:$0xf]
    %v180 = vld [vmem:[#allocation5 + $0x16c] sm:$0xf]
    %v181 = vld [vmem:[#allocation5 + $0x170] sm:$0xf]
    %v182 = vld [vmem:[#allocation5 + $0x174] sm:$0xf]
    %v183 = vld [vmem:[#allocation5 + $0x178] sm:$0xf]
    %v184 = vld [vmem:[#allocation5 + $0x17c] sm:$0xf]
    %v185 = vld [vmem:[#allocation5 + $0x180] sm:$0xf]
    %v186 = vld [vmem:[#allocation5 + $0x184] sm:$0xf]
    %v187 = vld [vmem:[%s4] sm:$0x1]
    %v188 = vlaneseq
    %v189 = vshrl.u32 %v188, 7
    %v190 = vsub.s32 0, %v189
    %v191 = vrot.slane %v187, %v190
    %v290 = vunpack.c.l.b16 %v89
    %v291 = vunpack.c.l.b16 %v90
    %v292 = vunpack.c.l.b16 %v91
    %v293 = vunpack.c.l.b16 %v92
    %v294 = vunpack.c.l.b16 %v93
    %v295 = vunpack.c.l.b16 %v94
    %v296 = vunpack.c.l.b16 %v95
    %v297 = vunpack.c.l.b16 %v96
    %v298 = vunpack.c.l.b16 %v97
    %v299 = vunpack.c.l.b16 %v98
    %v300 = vunpack.c.l.b16 %v99
    %v301 = vunpack.c.l.b16 %v100
    %v302 = vunpack.c.l.b16 %v101
    %v303 = vunpack.c.l.b16 %v102
    %v304 = vunpack.c.l.b16 %v103
    %v305 = vunpack.c.l.b16 %v104
    %v306 = vunpack.c.l.b16 %v105
    %v307 = vunpack.c.l.b16 %v106
    %v308 = vunpack.c.l.b16 %v107
    %v309 = vunpack.c.l.b16 %v108
    %v310 = vunpack.c.l.b16 %v109
    %v311 = vunpack.c.l.b16 %v110
    %v312 = vunpack.c.l.b16 %v111
    %v313 = vunpack.c.l.b16 %v112
    %v314 = vunpack.c.l.b16 %v113
    %v315 = vunpack.c.l.b16 %v114
    %v316 = vunpack.c.l.b16 %v115
    %v317 = vunpack.c.l.b16 %v116
    %v318 = vunpack.c.l.b16 %v117
    %v319 = vunpack.c.l.b16 %v118
    %v320 = vunpack.c.l.b16 %v119
    %v321 = vunpack.c.l.b16 %v120
    %v322 = vunpack.c.l.b16 %v121
    %v323 = vunpack.c.l.b16 %v122
    %v324 = vunpack.c.l.b16 %v123
    %v325 = vunpack.c.l.b16 %v124
    %v326 = vunpack.c.l.b16 %v125
    %v327 = vunpack.c.l.b16 %v126
    %v328 = vunpack.c.l.b16 %v127
    %v329 = vunpack.c.l.b16 %v128
    %v330 = vunpack.c.l.b16 %v129
    %v331 = vunpack.c.l.b16 %v130
    %v332 = vunpack.c.l.b16 %v131
    %v333 = vunpack.c.l.b16 %v132
    %v334 = vunpack.c.l.b16 %v133
    %v335 = vunpack.c.l.b16 %v134
    %v336 = vunpack.c.l.b16 %v135
    %v337 = vunpack.c.l.b16 %v136
    %v338 = vunpack.c.l.b16 %v137
    %v339 = vunpack.c.l.b16 %v138
    %v340 = vunpack.c.l.b16 %v139
    %v341 = vunpack.c.l.b16 %v140
    %v342 = vunpack.c.l.b16 %v141
    %v343 = vunpack.c.l.b16 %v142
    %v344 = vunpack.c.l.b16 %v143
    %v345 = vunpack.c.l.b16 %v144
    %v346 = vunpack.c.l.b16 %v145
    %v347 = vunpack.c.l.b16 %v146
    %v348 = vunpack.c.l.b16 %v147
    %v349 = vunpack.c.l.b16 %v148
    %v350 = vunpack.c.l.b16 %v149
    %v351 = vunpack.c.l.b16 %v150
    %v352 = vunpack.c.l.b16 %v151
    %v353 = vunpack.c.l.b16 %v152
    %v354 = vunpack.c.l.b16 %v153
    %v355 = vunpack.c.l.b16 %v154
    %v356 = vunpack.c.l.b16 %v155
    %v357 = vunpack.c.l.b16 %v156
    %v358 = vunpack.c.l.b16 %v157
    %v359 = vunpack.c.l.b16 %v158
    %v360 = vunpack.c.l.b16 %v159
    %v361 = vunpack.c.l.b16 %v160
    %v362 = vunpack.c.l.b16 %v161
    %v363 = vunpack.c.l.b16 %v162
    %v364 = vunpack.c.l.b16 %v163
    %v365 = vunpack.c.l.b16 %v164
    %v366 = vunpack.c.l.b16 %v165
    %v367 = vunpack.c.l.b16 %v166
    %v368 = vunpack.c.l.b16 %v167
    %v369 = vunpack.c.l.b16 %v168
    %v370 = vunpack.c.l.b16 %v169
    %v371 = vunpack.c.l.b16 %v170
    %v372 = vunpack.c.l.b16 %v171
    %v373 = vunpack.c.l.b16 %v172
    %v374 = vunpack.c.l.b16 %v173
    %v375 = vunpack.c.l.b16 %v174
    %v376 = vunpack.c.l.b16 %v175
    %v377 = vunpack.c.l.b16 %v176
    %v378 = vunpack.c.l.b16 %v177
    %v379 = vunpack.c.l.b16 %v178
    %v380 = vunpack.c.l.b16 %v179
    %v381 = vunpack.c.l.b16 %v180
    %v382 = vunpack.c.l.b16 %v181
    %v383 = vunpack.c.l.b16 %v182
    %v384 = vunpack.c.l.b16 %v183
    %v385 = vunpack.c.l.b16 %v184
    %v386 = vunpack.c.l.b16 %v185
    %v387 = vunpack.c.l.b16 %v186
    %v388 = vpack.c.b16 %v291, %v290
    %v389 = vpack.c.b16 %v293, %v292
    %v390 = vpack.c.b16 %v295, %v294
    %v391 = vpack.c.b16 %v297, %v296
    %v392 = vpack.c.b16 %v299, %v298
    %v393 = vpack.c.b16 %v301, %v300
    %v394 = vpack.c.b16 %v303, %v302
    %v395 = vpack.c.b16 %v305, %v304
    %v396 = vpack.c.b16 %v307, %v306
    %v397 = vpack.c.b16 %v309, %v308
    %v398 = vpack.c.b16 %v311, %v310
    %v399 = vpack.c.b16 %v313, %v312
    %v400 = vpack.c.b16 %v315, %v314
    %v401 = vpack.c.b16 %v317, %v316
    %v402 = vpack.c.b16 %v319, %v318
    %v403 = vpack.c.b16 %v321, %v320
    %v404 = vpack.c.b16 %v323, %v322
    %v405 = vpack.c.b16 %v325, %v324
    %v406 = vpack.c.b16 %v327, %v326
    %v407 = vpack.c.b16 %v329, %v328
    %v408 = vpack.c.b16 %v331, %v330
    %v409 = vpack.c.b16 %v333, %v332
    %v410 = vpack.c.b16 %v335, %v334
    %v411 = vpack.c.b16 %v337, %v336
    %v412 = vpack.c.b16 %v339, %v338
    %v413 = vpack.c.b16 %v341, %v340
    %v414 = vpack.c.b16 %v343, %v342
    %v415 = vpack.c.b16 %v345, %v344
    %v416 = vpack.c.b16 %v347, %v346
    %v417 = vpack.c.b16 %v349, %v348
    %v418 = vpack.c.b16 %v351, %v350
    %v419 = vpack.c.b16 %v353, %v352
    %v420 = vpack.c.b16 %v355, %v354
    %v421 = vpack.c.b16 %v357, %v356
    %v422 = vpack.c.b16 %v359, %v358
    %v423 = vpack.c.b16 %v361, %v360
    %v424 = vpack.c.b16 %v363, %v362
    %v425 = vpack.c.b16 %v365, %v364
    %v426 = vpack.c.b16 %v367, %v366
    %v427 = vpack.c.b16 %v369, %v368
    %v428 = vpack.c.b16 %v371, %v370
    %v429 = vpack.c.b16 %v373, %v372
    %v430 = vpack.c.b16 %v375, %v374
    %v431 = vpack.c.b16 %v377, %v376
    %v432 = vpack.c.b16 %v379, %v378
    %v433 = vpack.c.b16 %v381, %v380
    %v434 = vpack.c.b16 %v383, %v382
    %v435 = vpack.c.b16 %v385, %v384
    %v436 = vpack.c.b16 %v387, %v386
    %vm486 = vcmask 130048
    %v488 = vsel %vm486, %v88, 0
    %490 = vmatprep.subr.bf16.mxu0 0
    %491 = vmatpush1.bf16.msra.mxu0 %v395
    %492 = vmatprep.subr.bf16.mxu0 0
    %493 = vmatpush1.bf16.msra.mxu0 %v394
    %494 = vmatprep.subr.bf16.mxu0 0
    %495 = vmatpush1.bf16.msra.mxu0 %v393
    %496 = vmatprep.subr.bf16.mxu0 0
    %497 = vmatpush1.bf16.msra.mxu0 %v392
    %498 = vmatprep.subr.bf16.mxu0 0
    %499 = vmatpush1.bf16.msra.mxu0 %v391
    %500 = vmatprep.subr.bf16.mxu0 0
    %501 = vmatpush1.bf16.msra.mxu0 %v390
    %502 = vmatprep.subr.bf16.mxu0 0
    %503 = vmatpush1.bf16.msra.mxu0 %v389
    %504 = vmatprep.subr.bf16.mxu0 0
    %505 = vmatpush1.bf16.msra.mxu0 %v388
    %506 = vmatprep.subr.bf16.mxu0 0
    %507 = vmatpush2.bf16.msra.mxu0 %v403
    %508 = vmatprep.subr.bf16.mxu0 0
    %509 = vmatpush2.bf16.msra.mxu0 %v402
    %510 = vmatprep.subr.bf16.mxu0 0
    %511 = vmatpush2.bf16.msra.mxu0 %v401
    %512 = vmatprep.subr.bf16.mxu0 0
    %513 = vmatpush2.bf16.msra.mxu0 %v400
    %514 = vmatprep.subr.bf16.mxu0 0
    %515 = vmatpush2.bf16.msra.mxu0 %v399
    %516 = vmatprep.subr.bf16.mxu0 0
    %517 = vmatpush2.bf16.msra.mxu0 %v398
    %518 = vmatprep.subr.bf16.mxu0 0
    %519 = vmatpush2.bf16.msra.mxu0 %v397
    %520 = vmatprep.subr.bf16.mxu0 0
    %521 = vmatpush2.bf16.msra.mxu0 %v396
    %522 = vmatprep.mubr.bf16.mxu0 %v83
    %523 = vmatmul.mubr.bf16.gmra.mxu0 %v82
    %v524 = vpop.f32.mrf.mxu0
    %v525 = vadd.f32 %v191, %v524
    %v526 = vpop.f32.mrf.mxu0
    %v527 = vpop.f32.mrf.mxu0
    %v528 = vpop.f32.mrf.mxu0
    %529 = vdwg.mxu0
    %530 = vmatprep.subr.bf16.mxu0 0
    %531 = vmatpush1.bf16.msra.mxu0 %v411
    %532 = vmatprep.subr.bf16.mxu0 0
    %533 = vmatpush1.bf16.msra.mxu0 %v410
    %534 = vmatprep.subr.bf16.mxu0 0
    %535 = vmatpush1.bf16.msra.mxu0 %v409
    %536 = vmatprep.subr.bf16.mxu0 0
    %537 = vmatpush1.bf16.msra.mxu0 %v408
    %538 = vmatprep.subr.bf16.mxu0 0
    %539 = vmatpush1.bf16.msra.mxu0 %v407
    %540 = vmatprep.subr.bf16.mxu0 0
    %541 = vmatpush1.bf16.msra.mxu0 %v406
    %542 = vmatprep.subr.bf16.mxu0 0
    %543 = vmatpush1.bf16.msra.mxu0 %v405
    %544 = vmatprep.subr.bf16.mxu0 0
    %545 = vmatpush1.bf16.msra.mxu0 %v404
    %546 = vmatprep.subr.bf16.mxu0 0
    %547 = vmatpush2.bf16.msra.mxu0 %v419
    %548 = vmatprep.subr.bf16.mxu0 0
    %549 = vmatpush2.bf16.msra.mxu0 %v418
    %550 = vmatprep.subr.bf16.mxu0 0
    %551 = vmatpush2.bf16.msra.mxu0 %v417
    %552 = vmatprep.subr.bf16.mxu0 0
    %553 = vmatpush2.bf16.msra.mxu0 %v416
    %554 = vmatprep.subr.bf16.mxu0 0
    %555 = vmatpush2.bf16.msra.mxu0 %v415
    %556 = vmatprep.subr.bf16.mxu0 0
    %557 = vmatpush2.bf16.msra.mxu0 %v414
    %558 = vmatprep.subr.bf16.mxu0 0
    %559 = vmatpush2.bf16.msra.mxu0 %v413
    %560 = vmatprep.subr.bf16.mxu0 0
    %561 = vmatpush2.bf16.msra.mxu0 %v412
    %562 = vmatprep.mubr.bf16.mxu0 %v85
    %563 = vmatmul.mubr.bf16.gmra.mxu0 %v84
    %v564 = vpop.f32.mrf.mxu0
    %v565 = vadd.f32 %v525, %v564
    %v566 = vpop.f32.mrf.mxu0
    %v567 = vpop.f32.mrf.mxu0
    %v568 = vpop.f32.mrf.mxu0
    %569 = vdwg.mxu0
    %570 = vmatprep.subr.bf16.mxu0 0
    %571 = vmatpush1.bf16.msra.mxu0 %v427
    %572 = vmatprep.subr.bf16.mxu0 0
    %573 = vmatpush1.bf16.msra.mxu0 %v426
    %574 = vmatprep.subr.bf16.mxu0 0
    %575 = vmatpush1.bf16.msra.mxu0 %v425
    %576 = vmatprep.subr.bf16.mxu0 0
    %577 = vmatpush1.bf16.msra.mxu0 %v424
    %578 = vmatprep.subr.bf16.mxu0 0
    %579 = vmatpush1.bf16.msra.mxu0 %v423
    %580 = vmatprep.subr.bf16.mxu0 0
    %581 = vmatpush1.bf16.msra.mxu0 %v422
    %582 = vmatprep.subr.bf16.mxu0 0
    %583 = vmatpush1.bf16.msra.mxu0 %v421
    %584 = vmatprep.subr.bf16.mxu0 0
    %585 = vmatpush1.bf16.msra.mxu0 %v420
    %586 = vmatprep.subr.bf16.mxu0 0
    %587 = vmatpush2.bf16.msra.mxu0 %v435
    %588 = vmatprep.subr.bf16.mxu0 0
    %589 = vmatpush2.bf16.msra.mxu0 %v434
    %590 = vmatprep.subr.bf16.mxu0 0
    %591 = vmatpush2.bf16.msra.mxu0 %v433
    %592 = vmatprep.subr.bf16.mxu0 0
    %593 = vmatpush2.bf16.msra.mxu0 %v432
    %594 = vmatprep.subr.bf16.mxu0 0
    %595 = vmatpush2.bf16.msra.mxu0 %v431
    %596 = vmatprep.subr.bf16.mxu0 0
    %597 = vmatpush2.bf16.msra.mxu0 %v430
    %598 = vmatprep.subr.bf16.mxu0 0
    %599 = vmatpush2.bf16.msra.mxu0 %v429
    %600 = vmatprep.subr.bf16.mxu0 0
    %601 = vmatpush2.bf16.msra.mxu0 %v428
    %602 = vmatprep.mubr.bf16.mxu0 %v87
    %603 = vmatmul.mubr.bf16.gmra.mxu0 %v86
    %v604 = vpop.f32.mrf.mxu0
    %v605 = vadd.f32 %v565, %v604
    %v606 = vpop.f32.mrf.mxu0
    %v607 = vpop.f32.mrf.mxu0
    %v608 = vpop.f32.mrf.mxu0
    %609 = vdwg.mxu0
    %610 = vmatprep.subr.bf16.mxu0 0
    %611 = vmatpush1.bf16.msra.mxu0 0
    %612 = vmatprep.subr.bf16.mxu0 0
    %613 = vmatpush1.bf16.msra.mxu0 0
    %614 = vmatprep.subr.bf16.mxu0 0
    %615 = vmatpush1.bf16.msra.mxu0 0
    %616 = vmatprep.subr.bf16.mxu0 0
    %617 = vmatpush1.bf16.msra.mxu0 0
    %618 = vmatprep.subr.bf16.mxu0 0
    %619 = vmatpush1.bf16.msra.mxu0 0
    %620 = vmatprep.subr.bf16.mxu0 0
    %621 = vmatpush1.bf16.msra.mxu0 0
    %622 = vmatprep.subr.bf16.mxu0 0
    %623 = vmatpush1.bf16.msra.mxu0 0
    %624 = vmatprep.subr.bf16.mxu0 0
    %625 = vmatpush1.bf16.msra.mxu0 %v436
    %626 = vmatprep.subr.bf16.mxu0 0
    %627 = vmatpush2.bf16.msra.mxu0 0
    %628 = vmatprep.subr.bf16.mxu0 0
    %629 = vmatpush2.bf16.msra.mxu0 0
    %630 = vmatprep.subr.bf16.mxu0 0
    %631 = vmatpush2.bf16.msra.mxu0 0
    %632 = vmatprep.subr.bf16.mxu0 0
    %633 = vmatpush2.bf16.msra.mxu0 0
    %634 = vmatprep.subr.bf16.mxu0 0
    %635 = vmatpush2.bf16.msra.mxu0 0
    %636 = vmatprep.subr.bf16.mxu0 0
    %637 = vmatpush2.bf16.msra.mxu0 0
    %638 = vmatprep.subr.bf16.mxu0 0
    %639 = vmatpush2.bf16.msra.mxu0 0
    %640 = vmatprep.subr.bf16.mxu0 0
    %641 = vmatpush2.bf16.msra.mxu0 0
    %642 = vmatprep.mubr.bf16.mxu0 0
    %643 = vmatmul.mubr.bf16.gmra.mxu0 %v488
    %v644 = vpop.f32.mrf.mxu0
    %v645 = vadd.f32 %v605, %v644
    %v646 = vpop.f32.mrf.mxu0
    %v647 = vpop.f32.mrf.mxu0
    %v648 = vpop.f32.mrf.mxu0
    %649 = vdwg.mxu0
    %v650 = vmax.f32 %v645, 0.0
    %v651 = vpack.c.bf16 %v650, %v650
    %v652 = vld [vmem:[#allocation7] sm:$0xf]
    %v653 = vld [vmem:[#allocation7 + $0x4] sm:$0xf]
    %v654 = vld [vmem:[#allocation7 + $0x8] sm:$0xf]
    %v655 = vld [vmem:[#allocation7 + $0xc] sm:$0xf]
    %v656 = vld [vmem:[#allocation7 + $0x10] sm:$0xf]
    %v657 = vld [vmem:[#allocation7 + $0x14] sm:$0xf]
    %v658 = vld [vmem:[#allocation7 + $0x18] sm:$0xf]
    %v659 = vld [vmem:[#allocation7 + $0x1c] sm:$0xf]
    %v660 = vld [vmem:[#allocation7 + $0x20] sm:$0xf]
    %v661 = vld [vmem:[#allocation7 + $0x24] sm:$0xf]
    %v662 = vld [vmem:[#allocation7 + $0x28] sm:$0xf]
    %v663 = vld [vmem:[#allocation7 + $0x2c] sm:$0xf]
    %v664 = vld [vmem:[#allocation7 + $0x30] sm:$0xf]
    %v665 = vld [vmem:[#allocation7 + $0x34] sm:$0xf]
    %v666 = vld [vmem:[#allocation7 + $0x38] sm:$0xf]
    %v667 = vld [vmem:[#allocation7 + $0x3c] sm:$0xf]
    %v668 = vld [vmem:[%s4 + $0x1] sm:$0x1]
    %v669 = vlaneseq
    %v670 = vshrl.u32 %v669, 7
    %v671 = vsub.s32 0, %v670
    %v672 = vrot.slane %v668, %v671
    %v689 = vunpack.c.l.b16 %v652
    %v690 = vunpack.c.l.b16 %v653
    %v691 = vunpack.c.l.b16 %v654
    %v692 = vunpack.c.l.b16 %v655
    %v693 = vunpack.c.l.b16 %v656
    %v694 = vunpack.c.l.b16 %v657
    %v695 = vunpack.c.l.b16 %v658
    %v696 = vunpack.c.l.b16 %v659
    %v697 = vunpack.c.l.b16 %v660
    %v698 = vunpack.c.l.b16 %v661
    %v699 = vunpack.c.l.b16 %v662
    %v700 = vunpack.c.l.b16 %v663
    %v701 = vunpack.c.l.b16 %v664
    %v702 = vunpack.c.l.b16 %v665
    %v703 = vunpack.c.l.b16 %v666
    %v704 = vunpack.c.l.b16 %v667
    %v705 = vpack.c.b16 %v690, %v689
    %v706 = vpack.c.b16 %v692, %v691
    %v707 = vpack.c.b16 %v694, %v693
    %v708 = vpack.c.b16 %v696, %v695
    %v709 = vpack.c.b16 %v698, %v697
    %v710 = vpack.c.b16 %v700, %v699
    %v711 = vpack.c.b16 %v702, %v701
    %v712 = vpack.c.b16 %v704, %v703
    %721 = vmatprep.subr.bf16.mxu0 0
    %722 = vmatpush1.bf16.msra.mxu0 %v712
    %723 = vmatprep.subr.bf16.mxu0 0
    %724 = vmatpush1.bf16.msra.mxu0 %v711
    %725 = vmatprep.subr.bf16.mxu0 0
    %726 = vmatpush1.bf16.msra.mxu0 %v710
    %727 = vmatprep.subr.bf16.mxu0 0
    %728 = vmatpush1.bf16.msra.mxu0 %v709
    %729 = vmatprep.subr.bf16.mxu0 0
    %730 = vmatpush1.bf16.msra.mxu0 %v708
    %731 = vmatprep.subr.bf16.mxu0 0
    %732 = vmatpush1.bf16.msra.mxu0 %v707
    %733 = vmatprep.subr.bf16.mxu0 0
    %734 = vmatpush1.bf16.msra.mxu0 %v706
    %735 = vmatprep.subr.bf16.mxu0 0
    %736 = vmatpush1.bf16.msra.mxu0 %v705
    %737 = vmatprep.subr.bf16.mxu0 0
    %738 = vmatpush2.bf16.msra.mxu0 0
    %739 = vmatprep.subr.bf16.mxu0 0
    %740 = vmatpush2.bf16.msra.mxu0 0
    %741 = vmatprep.subr.bf16.mxu0 0
    %742 = vmatpush2.bf16.msra.mxu0 0
    %743 = vmatprep.subr.bf16.mxu0 0
    %744 = vmatpush2.bf16.msra.mxu0 0
    %745 = vmatprep.subr.bf16.mxu0 0
    %746 = vmatpush2.bf16.msra.mxu0 0
    %747 = vmatprep.subr.bf16.mxu0 0
    %748 = vmatpush2.bf16.msra.mxu0 0
    %749 = vmatprep.subr.bf16.mxu0 0
    %750 = vmatpush2.bf16.msra.mxu0 0
    %751 = vmatprep.subr.bf16.mxu0 0
    %752 = vmatpush2.bf16.msra.mxu0 0
    %753 = vmatprep.mubr.bf16.mxu0 0
    %754 = vmatmul.mubr.bf16.gmra.mxu0 %v651
    %v755 = vpop.f32.mrf.mxu0
    %v756 = vadd.f32 %v672, %v755
    %v757 = vpop.f32.mrf.mxu0
    %v758 = vpop.f32.mrf.mxu0
    %v759 = vpop.f32.mrf.mxu0
    %760 = vdwg.mxu0
    %v761 = vmax.f32 %v756, 0.0
    %v762 = vpack.c.bf16 %v761, %v761
    %s763 = scalar_lea.vmem [#allocation7], 64
    %v764 = vld [vmem:[%s763] sm:$0xf]
    %v765 = vld [vmem:[%s763 + $0x4] sm:$0xf]
    %v766 = vld [vmem:[%s763 + $0x8] sm:$0xf]
    %v767 = vld [vmem:[%s763 + $0xc] sm:$0xf]
    %v768 = vld [vmem:[%s763 + $0x10] sm:$0xf]
    %v769 = vld [vmem:[%s763 + $0x14] sm:$0xf]
    %v770 = vld [vmem:[%s763 + $0x18] sm:$0xf]
    %v771 = vld [vmem:[%s763 + $0x1c] sm:$0xf]
    %v772 = vld [vmem:[%s763 + $0x20] sm:$0xf]
    %v773 = vld [vmem:[%s763 + $0x24] sm:$0xf]
    %v774 = vld [vmem:[%s763 + $0x28] sm:$0xf]
    %v775 = vld [vmem:[%s763 + $0x2c] sm:$0xf]
    %v776 = vld [vmem:[%s763 + $0x30] sm:$0xf]
    %v777 = vld [vmem:[%s763 + $0x34] sm:$0xf]
    %v778 = vld [vmem:[%s763 + $0x38] sm:$0xf]
    %v779 = vld [vmem:[%s763 + $0x3c] sm:$0xf]
    %v780 = vld [vmem:[%s4 + $0x2] sm:$0x1]
    %v781 = vlaneseq
    %v782 = vshrl.u32 %v781, 7
    %v783 = vsub.s32 0, %v782
    %v784 = vrot.slane %v780, %v783
    %v801 = vunpack.c.l.b16 %v764
    %v802 = vunpack.c.l.b16 %v765
    %v803 = vunpack.c.l.b16 %v766
    %v804 = vunpack.c.l.b16 %v767
    %v805 = vunpack.c.l.b16 %v768
    %v806 = vunpack.c.l.b16 %v769
    %v807 = vunpack.c.l.b16 %v770
    %v808 = vunpack.c.l.b16 %v771
    %v809 = vunpack.c.l.b16 %v772
    %v810 = vunpack.c.l.b16 %v773
    %v811 = vunpack.c.l.b16 %v774
    %v812 = vunpack.c.l.b16 %v775
    %v813 = vunpack.c.l.b16 %v776
    %v814 = vunpack.c.l.b16 %v777
    %v815 = vunpack.c.l.b16 %v778
    %v816 = vunpack.c.l.b16 %v779
    %v817 = vpack.c.b16 %v802, %v801
    %v818 = vpack.c.b16 %v804, %v803
    %v819 = vpack.c.b16 %v806, %v805
    %v820 = vpack.c.b16 %v808, %v807
    %v821 = vpack.c.b16 %v810, %v809
    %v822 = vpack.c.b16 %v812, %v811
    %v823 = vpack.c.b16 %v814, %v813
    %v824 = vpack.c.b16 %v816, %v815
    %833 = vmatprep.subr.bf16.mxu0 0
    %834 = vmatpush1.bf16.msra.mxu0 %v824
    %835 = vmatprep.subr.bf16.mxu0 0
    %836 = vmatpush1.bf16.msra.mxu0 %v823
    %837 = vmatprep.subr.bf16.mxu0 0
    %838 = vmatpush1.bf16.msra.mxu0 %v822
    %839 = vmatprep.subr.bf16.mxu0 0
    %840 = vmatpush1.bf16.msra.mxu0 %v821
    %841 = vmatprep.subr.bf16.mxu0 0
    %842 = vmatpush1.bf16.msra.mxu0 %v820
    %843 = vmatprep.subr.bf16.mxu0 0
    %844 = vmatpush1.bf16.msra.mxu0 %v819
    %845 = vmatprep.subr.bf16.mxu0 0
    %846 = vmatpush1.bf16.msra.mxu0 %v818
    %847 = vmatprep.subr.bf16.mxu0 0
    %848 = vmatpush1.bf16.msra.mxu0 %v817
    %849 = vmatprep.subr.bf16.mxu0 0
    %850 = vmatpush2.bf16.msra.mxu0 0
    %851 = vmatprep.subr.bf16.mxu0 0
    %852 = vmatpush2.bf16.msra.mxu0 0
    %853 = vmatprep.subr.bf16.mxu0 0
    %854 = vmatpush2.bf16.msra.mxu0 0
    %855 = vmatprep.subr.bf16.mxu0 0
    %856 = vmatpush2.bf16.msra.mxu0 0
    %857 = vmatprep.subr.bf16.mxu0 0
    %858 = vmatpush2.bf16.msra.mxu0 0
    %859 = vmatprep.subr.bf16.mxu0 0
    %860 = vmatpush2.bf16.msra.mxu0 0
    %861 = vmatprep.subr.bf16.mxu0 0
    %862 = vmatpush2.bf16.msra.mxu0 0
    %863 = vmatprep.subr.bf16.mxu0 0
    %864 = vmatpush2.bf16.msra.mxu0 0
    %865 = vmatprep.mubr.bf16.mxu0 0
    %866 = vmatmul.mubr.bf16.gmra.mxu0 %v762
    %v867 = vpop.f32.mrf.mxu0
    %v868 = vadd.f32 %v784, %v867
    %v869 = vpop.f32.mrf.mxu0
    %v870 = vpop.f32.mrf.mxu0
    %v871 = vpop.f32.mrf.mxu0
    %872 = vdwg.mxu0
    %v873 = vmax.f32 %v868, 0.0
    %v874 = vpack.c.bf16 %v873, %v873
    %v875 = vld [vmem:[#allocation8] sm:$0xf]
    %v876 = vld [vmem:[#allocation8 + $0x4] sm:$0xf]
    %v877 = vld [vmem:[#allocation8 + $0x8] sm:$0xf]
    %v878 = vld [vmem:[#allocation8 + $0xc] sm:$0xf]
    %v879 = vld [vmem:[#allocation8 + $0x10] sm:$0xf]
    %v880 = vld [vmem:[#allocation8 + $0x14] sm:$0xf]
    %v881 = vld [vmem:[#allocation8 + $0x18] sm:$0xf]
    %v882 = vld [vmem:[#allocation8 + $0x1c] sm:$0xf]
    %v883 = vld [vmem:[#allocation8 + $0x20] sm:$0xf]
    %v884 = vld [vmem:[#allocation8 + $0x24] sm:$0xf]
    %v885 = vld [vmem:[#allocation8 + $0x28] sm:$0xf]
    %v886 = vld [vmem:[#allocation8 + $0x2c] sm:$0xf]
    %v887 = vld [vmem:[#allocation8 + $0x30] sm:$0xf]
    %v888 = vld [vmem:[#allocation8 + $0x34] sm:$0xf]
    %v889 = vld [vmem:[#allocation8 + $0x38] sm:$0xf]
    %v890 = vld [vmem:[#allocation8 + $0x3c] sm:$0xf]
    %v891 = vld [vmem:[%s4 + $0x3] sm:$0x1]
    %v892 = vlaneseq
    %v893 = vshrl.u32 %v892, 7
    %v894 = vsub.s32 0, %v893
    %v895 = vrot.slane %v891, %v894
    %v912 = vunpack.c.l.b16 %v875
    %v913 = vunpack.c.l.b16 %v876
    %v914 = vunpack.c.l.b16 %v877
    %v915 = vunpack.c.l.b16 %v878
    %v916 = vunpack.c.l.b16 %v879
    %v917 = vunpack.c.l.b16 %v880
    %v918 = vunpack.c.l.b16 %v881
    %v919 = vunpack.c.l.b16 %v882
    %v920 = vunpack.c.l.b16 %v883
    %v921 = vunpack.c.l.b16 %v884
    %v922 = vunpack.c.l.b16 %v885
    %v923 = vunpack.c.l.b16 %v886
    %v924 = vunpack.c.l.b16 %v887
    %v925 = vunpack.c.l.b16 %v888
    %v926 = vunpack.c.l.b16 %v889
    %v927 = vunpack.c.l.b16 %v890
    %v928 = vpack.c.b16 %v913, %v912
    %v929 = vpack.c.b16 %v915, %v914
    %v930 = vpack.c.b16 %v917, %v916
    %v931 = vpack.c.b16 %v919, %v918
    %v932 = vpack.c.b16 %v921, %v920
    %v933 = vpack.c.b16 %v923, %v922
    %v934 = vpack.c.b16 %v925, %v924
    %v935 = vpack.c.b16 %v927, %v926
    %944 = vmatprep.subr.bf16.mxu0 0
    %945 = vmatpush1.bf16.msra.mxu0 %v935
    %946 = vmatprep.subr.bf16.mxu0 0
    %947 = vmatpush1.bf16.msra.mxu0 %v934
    %948 = vmatprep.subr.bf16.mxu0 0
    %949 = vmatpush1.bf16.msra.mxu0 %v933
    %950 = vmatprep.subr.bf16.mxu0 0
    %951 = vmatpush1.bf16.msra.mxu0 %v932
    %952 = vmatprep.subr.bf16.mxu0 0
    %953 = vmatpush1.bf16.msra.mxu0 %v931
    %954 = vmatprep.subr.bf16.mxu0 0
    %955 = vmatpush1.bf16.msra.mxu0 %v930
    %956 = vmatprep.subr.bf16.mxu0 0
    %957 = vmatpush1.bf16.msra.mxu0 %v929
    %958 = vmatprep.subr.bf16.mxu0 0
    %959 = vmatpush1.bf16.msra.mxu0 %v928
    %960 = vmatprep.subr.bf16.mxu0 0
    %961 = vmatpush2.bf16.msra.mxu0 0
    %962 = vmatprep.subr.bf16.mxu0 0
    %963 = vmatpush2.bf16.msra.mxu0 0
    %964 = vmatprep.subr.bf16.mxu0 0
    %965 = vmatpush2.bf16.msra.mxu0 0
    %966 = vmatprep.subr.bf16.mxu0 0
    %967 = vmatpush2.bf16.msra.mxu0 0
    %968 = vmatprep.subr.bf16.mxu0 0
    %969 = vmatpush2.bf16.msra.mxu0 0
    %970 = vmatprep.subr.bf16.mxu0 0
    %971 = vmatpush2.bf16.msra.mxu0 0
    %972 = vmatprep.subr.bf16.mxu0 0
    %973 = vmatpush2.bf16.msra.mxu0 0
    %974 = vmatprep.subr.bf16.mxu0 0
    %975 = vmatpush2.bf16.msra.mxu0 0
    %976 = vmatprep.mubr.bf16.mxu0 0
    %977 = vmatmul.mubr.bf16.gmra.mxu0 %v874
    %v978 = vpop.f32.mrf.mxu0
    %v979 = vadd.f32 %v895, %v978
    %v980 = vpop.f32.mrf.mxu0
    %v981 = vpop.f32.mrf.mxu0
    %v982 = vpop.f32.mrf.mxu0
    %983 = vdwg.mxu0
    %984 = vmax.xlane.f32.xlu0 %v979
    %v985 = vpop.xlane.xlu0 %984
    %v986 = vsub.f32 %v979, %v985
    %v987 = vmul.f32 %v986, 1.442695
    %v988 = vpow.pop %v987
    %989 = vadd.xlane.f32.xlu0 %v988
    %v990 = vpop.xlane.xlu0 %989
    %v991 = vlog2.pop %v990
    %v992 = vmul.f32 %v991, 0.6931472
    %v993 = vsub.f32 %v986, %v992
    %994 = vst.msk [vmem:[#allocation10] sm:$0xff] %vm486, %v993
    // Predicated region
    $region38: #{tpu_custom_call.1} parent=1 // pred_check
      _
    $region39: #{tpu_custom_call.1} parent=1 // pred_check_branch
      %996 = sbr.rel (0) target = $region41
    $region40: #{tpu_custom_call.1} parent=1 // pred_region
      %s998 = ssub.s32 128, 128
      %999 = vsyncadd [#allocation4], %s998
      %s1001 = sshll.u32 [#allocation10], 4
      %s1002 = int_to_ptr.vmem [resolvable:$true] %s1001
      %1004 = dma.vmem_to_hbm [thread:$0]  %s1002, 128, %s5, [#allocation4]
    $region41: #{tpu_custom_call.1} parent=1 // pred_fallthru
      _
    // Predicated region
    $region42: #{tpu_custom_call.1} parent=1 // pred_check
      _
    $region43: #{tpu_custom_call.1} parent=1 // pred_check_branch
      %1006 = sbr.rel (0) target = $region45
    $region44: #{tpu_custom_call.1} parent=1 // pred_region
      %1007 = dma.done [#allocation4], 128
    $region45: #{tpu_custom_call.1} parent=1 // pred_fallthru
      _
    %1008 = vsyncpa [#allocation3], 1
    %1009 = vsyncpa [#allocation6], 1
    %1010 = vsyncpa [#allocation9], 1
    %1011 = vsyncpa [#allocation4], 1

</llo_original>
